<compile_context>
chip_gen: v7x
topology: tpu7x:2x2x1
jax: 0.10.0
libtpu: 0.0.40
codegen_flags: <defaults>
</compile_context>

<pallas_src>
import functools
import math

import jax
import jax.numpy as jnp
from jax.experimental import pallas as pl
from jax.experimental.pallas import tpu as pltpu

N_STATE = 8
M_CONTROL = 3          # unused by forward, kept for module-shape fidelity
HIDDEN = 128
ROWS_PER = 16          # 1 value row + N_STATE Jacobian rows, padded to 2 sublane tiles
B_BLK_MAX = 128        # max problems per grid step (VMEM-safe even on v7x's 64 MiB)

# ---- packed-weight row layout: one lane-dense (TOTAL_ROWS, HIDDEN) f32 slab ----
OFF_W0 = 0                       # rows [0, 8)     : W0^T   (n, 128)
OFF_B0 = N_STATE                 # row 8           : b0
OFF_B1 = N_STATE + 1             # row 9           : b1
OFF_B2 = N_STATE + 2             # row 10          : b2
OFF_W34 = N_STATE + 3            # row 11          : fused (W3^T @ W4^T) as a (1,128) row
OFF_B34 = N_STATE + 4            # row 12          : fused bias (b3@W4^T + b4) at lane 0
OFF_CENTER = N_STATE + 5         # row 13          : (safe_m+safe_l)/2 at lanes [0, n)
OFF_INVR = N_STATE + 6           # row 14          : 2/(safe_m-safe_l) at lanes [0, n)
_HEAD = N_STATE + 7
_PAD = (-_HEAD) % 8              # pad head to a sublane-tile boundary (-> 16 rows)
OFF_SEL = _HEAD + _PAD           # rows [16, 32)   : (16,128) identity selector
OFF_W1 = OFF_SEL + ROWS_PER      # rows [32, 160)  : W1^T (128, 128)
OFF_W2 = OFF_W1 + HIDDEN         # rows [160, 288) : W2^T (128, 128)
TOTAL_ROWS = OFF_W2 + HIDDEN     # 288


# -----------------------------------------------------------------------------
# Simple deterministic "dynamics" stub (mirrors dynamics.state_limits /
# dynamics.safe_limits interface used by the module).
# -----------------------------------------------------------------------------
class Dynamics:
    n_dims = N_STATE

    def state_limits(self):
        su = jnp.linspace(1.0, 2.0, N_STATE, dtype=jnp.float32)
        sl = -su
        return su, sl

    def safe_limits(self, su, sl):
        safe_m = 0.9 * su
        safe_l = 0.5 * sl
        return safe_m, safe_l


# -----------------------------------------------------------------------------
# Pallas kernel: normalization + MLP + analytic Jacobian propagation.
# A block of b_blk problems is processed per grid step; each problem is the
# 16-row stacked operand [x_norm ; J^T ; pad].
# -----------------------------------------------------------------------------
def cbf_kernel(x_ref, wpk_ref, out_ref, *, b_blk):
    n, H, RPP = N_STATE, HIDDEN, ROWS_PER
    R = b_blk * RPP

    x = x_ref[...]                                            # (b_blk, n)

    # Normalization constants baked into the slab (module constants).
    center = wpk_ref[OFF_CENTER:OFF_CENTER + 1, :][:, 0:n]    # (1, n)
    inv_rng = wpk_ref[OFF_INVR:OFF_INVR + 1, :][:, 0:n]       # (1, n)
    # NOTE: matches torch — no guard for a degenerate safe interval (inf/nan).
    x_norm = (x - center) * inv_rng                           # (b_blk, n)

    # Loop-invariant masks (built once, reused in all layers).
    l_idx = jax.lax.broadcasted_iota(jnp.int32, (1, RPP, 1), 1)
    row0 = (l_idx == 0).astype(jnp.float32)                   # (1, RPP, 1)
    not_row0 = 1.0 - row0

    # Jacobian seed block (shared by every problem): rows 1..n hold diag(1/rng).
    ri = jax.lax.broadcasted_iota(jnp.int32, (RPP, n), 0)
    ci = jax.lax.broadcasted_iota(jnp.int32, (RPP, n), 1)
    jseed = (ri == ci + 1).astype(jnp.float32) * inv_rng      # (RPP, n)

    # Stacked operand S: per problem [x_norm ; diag(1/rng) ; zero pad].
    s3 = row0 * x_norm[:, None, :] + jseed[None, :, :]        # (b_blk, RPP, n)
    s = s3.reshape(R, n)

    # Static slices into the packed weight slab.
    w0t = wpk_ref[OFF_W0:OFF_W0 + n, :]                       # (n, 128)
    b0 = wpk_ref[OFF_B0:OFF_B0 + 1, :]                        # (1, 128)
    b1 = wpk_ref[OFF_B1:OFF_B1 + 1, :]
    b2 = wpk_ref[OFF_B2:OFF_B2 + 1, :]
    w34r = wpk_ref[OFF_W34:OFF_W34 + 1, :]                    # (1, 128) fused W3.W4
    b34r = wpk_ref[OFF_B34:OFF_B34 + 1, :]                    # (1, 128), b34 at lane 0
    sel = wpk_ref[OFF_SEL:OFF_SEL + RPP, :]                   # (16, 128) identity
    w1t = wpk_ref[OFF_W1:OFF_W1 + H, :]                       # (128, 128)
    w2t = wpk_ref[OFF_W2:OFF_W2 + H, :]                       # (128, 128)

    def layer(s2, wt, b):
        # One MXU dot covers value + Jacobian rows of every problem.
        h2 = jnp.dot(s2, wt, preferred_element_type=jnp.float32)   # (R, H)
        h3 = h2.reshape(b_blk, RPP, H)
        t = jnp.tanh(h3[:, 0:1, :] + b)         # value rows only get the bias
        d = 1.0 - t * t                         # tanh' broadcast to Jacobian rows
        return (row0 * t + not_row0 * (h3 * d)).reshape(R, H)

    s = layer(s, w0t, b0)                       # n   -> 128, Tanh
    s = layer(s, w1t, b1)                       # 128 -> 128, Tanh
    s = layer(s, w2t, b2)                       # 128 -> 128, Tanh

    # Fused Linear3+Linear4 on the VPU (lane reduce), then a tiny MXU dot with
    # the stored selector to lay each problem's [h, Jh, pad] along lanes.
    s3f = s.reshape(b_blk, RPP, H)
    rowdot = jnp.sum(s3f * w34r, axis=-1)                     # (b_blk, RPP)
    out = jnp.dot(rowdot, sel, preferred_element_type=jnp.float32)   # (b_blk, 128)
    out_ref[...] = out + b34r                   # b34 lands on lane 0 (the value h)


# -----------------------------------------------------------------------------
# Wrapper: pack params once; per call only x is DMA'd (weights: constant
# index_map -> fetched once per call), lane-dense (B, 128) output.
# -----------------------------------------------------------------------------
def pack_params(params, safe_m, safe_l):
    """params: list of (W^T (in,out), b (1,out)). Returns (TOTAL_ROWS, HIDDEN) slab."""
    (w0t, b0), (w1t, b1), (w2t, b2), (w3t, b3), (w4t, b4) = params

    # Linear3 has no activation -> fold it into the 128->1 output layer.
    w34 = (w3t @ w4t).reshape(1, HIDDEN)              # (1, 128)
    b34 = (b3 @ w4t + b4).reshape(1, 1)               # (1, 1)

    center = (safe_m + safe_l) * 0.5                  # (1, n)
    inv_rng = 2.0 / (safe_m - safe_l)                 # (1, n) == 1/((safe_m-safe_l)/2)

    def lane_pad(row):
        row = row.astype(jnp.float32)
        return jnp.pad(row, ((0, 0), (0, HIDDEN - row.shape[1])))

    rows = [w0t, b0, b1, b2, w34, lane_pad(b34), lane_pad(center), lane_pad(inv_rng)]
    if _PAD:
        rows.append(jnp.zeros((_PAD, HIDDEN), jnp.float32))
    rows.append(jnp.eye(ROWS_PER, HIDDEN, dtype=jnp.float32))   # sublane->lane selector
    rows.extend([w1t, w2t])

    packed = jnp.concatenate([r.astype(jnp.float32) for r in rows], axis=0)
    assert packed.shape == (TOTAL_ROWS, HIDDEN), packed.shape
    return packed


def _cbf_pallas(xs, packed_w, b_blk, grid_b):
    n = xs.shape[1]
    return pl.pallas_call(
        functools.partial(cbf_kernel, b_blk=b_blk),
        grid=(grid_b,),
        in_specs=[
            pl.BlockSpec((b_blk, n), lambda i: (i, 0)),
            # Constant index_map: the weight slab is DMA'd once per call.
            pl.BlockSpec((TOTAL_ROWS, HIDDEN), lambda i: (0, 0)),
        ],
        out_specs=pl.BlockSpec((b_blk, HIDDEN), lambda i: (i, 0)),
        out_shape=jax.ShapeDtypeStruct((grid_b * b_blk, HIDDEN), jnp.float32),
        compiler_params=pltpu.CompilerParams(dimension_semantics=("parallel",)),
    )(xs, packed_w)


@jax.jit
def cbf_forward_batched(xs, packed_w):
    """xs: (B, n_state). Returns (B, 1 + n_state): per state [h, dh/dx]."""
    B, n = xs.shape
    if B <= B_BLK_MAX:
        b_blk, b_pad = B, B
    else:
        b_blk = B_BLK_MAX
        b_pad = -(-B // b_blk) * b_blk
    xs_p = xs if b_pad == B else jnp.pad(xs, ((0, b_pad - B), (0, 0)))
    out = _cbf_pallas(xs_p, packed_w, b_blk, b_pad // b_blk)
    # Lanes beyond 1+n are zero padding; rows beyond B come from batch padding.
    return out[:B, :1 + n]


def cbf_forward(x, packed_w):
    """Module forward semantics: x (1, n_state) -> HJH (1, 1 + n_state)."""
    return cbf_forward_batched(x, packed_w)


# -----------------------------------------------------------------------------
# Deterministic parameter init (PyTorch nn.Linear-style uniform bounds).
# -----------------------------------------------------------------------------
def init_params(key):
    dims = [(N_STATE, HIDDEN), (HIDDEN, HIDDEN), (HIDDEN, HIDDEN),
            (HIDDEN, HIDDEN), (HIDDEN, 1)]
    params = []
    for fan_in, fan_out in dims:
        key, kw, kb = jax.random.split(key, 3)
        bound = 1.0 / math.sqrt(fan_in)
        wt = jax.random.uniform(kw, (fan_in, fan_out), jnp.float32, -bound, bound)
        b = jax.random.uniform(kb, (1, fan_out), jnp.float32, -bound, bound)
        params.append((wt, b))
    return params


def reference_forward(x, safe_m, safe_l, params):
    """Unfused pure-JAX reference mirroring CBF.forward / V_with_jacobian."""
    center = (safe_m + safe_l) * 0.5
    rng = (safe_m - safe_l) * 0.5
    xn = (x - center) / rng                        # (1, n)
    J = jnp.diag(1.0 / rng.reshape(-1))            # (n, n)
    V = xn
    for idx, (wt, b) in enumerate(params):
        V = V @ wt + b
        J = wt.T @ J
        if idx < 3:
            V = jnp.tanh(V)
            J = (1.0 - V * V).reshape(-1, 1) * J
    return jnp.hstack([V.reshape(1, 1), J.reshape(1, -1)])


if __name__ == "__main__":
    key = jax.random.PRNGKey(0)
    key, kx, kb = jax.random.split(key, 3)

    dyn = Dynamics()
    su, sl = dyn.state_limits()
    safe_m, safe_l = dyn.safe_limits(su, sl)
    safe_m = safe_m.reshape(1, N_STATE)
    safe_l = safe_l.reshape(1, N_STATE)

    params = init_params(key)
    packed_w = pack_params(params, safe_m, safe_l)

    # --- module-forward semantics: single state -> (1, 1 + n_state) ---
    x = jax.random.uniform(kx, (1, N_STATE), jnp.float32, -1.0, 1.0)
    hjh = jax.block_until_ready(cbf_forward(x, packed_w))
    hjh_ref = reference_forward(x, safe_m, safe_l, params)
    assert hjh.shape == (1, 1 + N_STATE), hjh.shape
    assert jnp.allclose(hjh, hjh_ref, rtol=3e-4, atol=1e-4), (hjh, hjh_ref)

    # --- batched path (the perf lever): many states in one pallas_call ---
    B = 16
    xbatch = jax.random.uniform(kb, (B, N_STATE), jnp.float32, -1.0, 1.0)
    hjh_b = jax.block_until_ready(cbf_forward_batched(xbatch, packed_w))
    hjh_b_ref = jnp.concatenate(
        [reference_forward(xbatch[i:i + 1], safe_m, safe_l, params) for i in range(B)],
        axis=0)
    assert hjh_b.shape == (B, 1 + N_STATE), hjh_b.shape
    assert jnp.allclose(hjh_b, hjh_b_ref, rtol=3e-4, atol=1e-4), (hjh_b, hjh_b_ref)

    print("KERNEL_OK")
</pallas_src>

<mosaic_0001>
module attributes {stable_mosaic.version = 11 : i64} {
  func.func @cbf_kernel(%arg0: i32, %arg1: memref<1x8xf32, #tpu.memory_space<vmem>>, %arg2: memref<288x128xf32, #tpu.memory_space<vmem>>, %arg3: memref<1x128xf32, #tpu.memory_space<vmem>>) attributes {dimension_semantics = [#tpu.dimension_semantics<parallel>], iteration_bounds = array<i64: 1>, scalar_prefetch = 0 : i64, scratch_operands = 0 : i64, tpu.core_type = #tpu.core_type<tc>, window_params = [{transform_indices = @transform_0, window_bounds = array<i64: 1, 8>}, {pipeline_mode = #tpu.pipeline_mode<synchronous>, transform_indices = @transform_1, window_bounds = array<i64: 288, 128>}, {transform_indices = @transform_2, window_bounds = array<i64: 1, 128>}]} {
    %c0 = arith.constant 0 : index
    %c0_0 = arith.constant 0 : index
    %0 = vector.load %arg1[%c0, %c0_0] : memref<1x8xf32, #tpu.memory_space<vmem>>, vector<1x8xf32>
    %c13 = arith.constant 13 : index
    %c0_1 = arith.constant 0 : index
    %1 = vector.load %arg2[%c13, %c0_1] : memref<288x128xf32, #tpu.memory_space<vmem>>, vector<1x128xf32>
    %2 = vector.extract_strided_slice %1 {offsets = [0, 0], sizes = [1, 8], strides = [1, 1]} : vector<1x128xf32> to vector<1x8xf32>
    %c14 = arith.constant 14 : index
    %c0_2 = arith.constant 0 : index
    %3 = vector.load %arg2[%c14, %c0_2] : memref<288x128xf32, #tpu.memory_space<vmem>>, vector<1x128xf32>
    %4 = vector.extract_strided_slice %3 {offsets = [0, 0], sizes = [1, 8], strides = [1, 1]} : vector<1x128xf32> to vector<1x8xf32>
    %5 = arith.subf %0, %2 : vector<1x8xf32>
    %6 = arith.mulf %5, %4 : vector<1x8xf32>
    %7 = tpu.iota {dimensions = array<i32: 1>} : vector<1x16x1xi32>
    %c0_i32 = arith.constant 0 : i32
    %8 = vector.broadcast %c0_i32 : i32 to vector<1x16x1xi32>
    %9 = arith.cmpi eq, %7, %8 : vector<1x16x1xi32>
    %10 = arith.extui %9 : vector<1x16x1xi1> to vector<1x16x1xi32>
    %11 = arith.sitofp %10 : vector<1x16x1xi32> to vector<1x16x1xf32>
    %cst = arith.constant 1.000000e+00 : f32
    %12 = vector.broadcast %cst : f32 to vector<1x16x1xf32>
    %13 = arith.subf %12, %11 : vector<1x16x1xf32>
    %14 = tpu.iota {dimensions = array<i32: 0>} : vector<16x8xi32>
    %15 = tpu.iota {dimensions = array<i32: 1>} : vector<16x8xi32>
    %c1_i32 = arith.constant 1 : i32
    %16 = vector.broadcast %c1_i32 : i32 to vector<16x8xi32>
    %17 = arith.addi %15, %16 : vector<16x8xi32>
    %18 = arith.cmpi eq, %14, %17 : vector<16x8xi32>
    %19 = arith.extui %18 : vector<16x8xi1> to vector<16x8xi32>
    %20 = arith.sitofp %19 : vector<16x8xi32> to vector<16x8xf32>
    %21 = vector.broadcast %4 : vector<1x8xf32> to vector<16x8xf32>
    %22 = arith.mulf %20, %21 : vector<16x8xf32>
    %23 = vector.shape_cast %6 : vector<1x8xf32> to vector<1x1x8xf32>
    %24 = vector.broadcast %11 : vector<1x16x1xf32> to vector<1x16x8xf32>
    %25 = vector.broadcast %23 : vector<1x1x8xf32> to vector<1x16x8xf32>
    %26 = arith.mulf %24, %25 : vector<1x16x8xf32>
    %27 = vector.shape_cast %22 : vector<16x8xf32> to vector<1x16x8xf32>
    %28 = arith.addf %26, %27 : vector<1x16x8xf32>
    %29 = vector.shape_cast %28 : vector<1x16x8xf32> to vector<16x8xf32>
    %c0_3 = arith.constant 0 : index
    %c0_4 = arith.constant 0 : index
    %30 = vector.load %arg2[%c0_3, %c0_4] : memref<288x128xf32, #tpu.memory_space<vmem>>, vector<8x128xf32>
    %c8 = arith.constant 8 : index
    %c0_5 = arith.constant 0 : index
    %31 = vector.load %arg2[%c8, %c0_5] : memref<288x128xf32, #tpu.memory_space<vmem>>, vector<1x128xf32>
    %c9 = arith.constant 9 : index
    %c0_6 = arith.constant 0 : index
    %32 = vector.load %arg2[%c9, %c0_6] : memref<288x128xf32, #tpu.memory_space<vmem>>, vector<1x128xf32>
    %c10 = arith.constant 10 : index
    %c0_7 = arith.constant 0 : index
    %33 = vector.load %arg2[%c10, %c0_7] : memref<288x128xf32, #tpu.memory_space<vmem>>, vector<1x128xf32>
    %c11 = arith.constant 11 : index
    %c0_8 = arith.constant 0 : index
    %34 = vector.load %arg2[%c11, %c0_8] : memref<288x128xf32, #tpu.memory_space<vmem>>, vector<1x128xf32>
    %c12 = arith.constant 12 : index
    %c0_9 = arith.constant 0 : index
    %35 = vector.load %arg2[%c12, %c0_9] : memref<288x128xf32, #tpu.memory_space<vmem>>, vector<1x128xf32>
    %c16 = arith.constant 16 : index
    %c0_10 = arith.constant 0 : index
    %36 = vector.load %arg2[%c16, %c0_10] : memref<288x128xf32, #tpu.memory_space<vmem>>, vector<16x128xf32>
    %c32 = arith.constant 32 : index
    %c0_11 = arith.constant 0 : index
    %37 = vector.load %arg2[%c32, %c0_11] : memref<288x128xf32, #tpu.memory_space<vmem>>, vector<128x128xf32>
    %c160 = arith.constant 160 : index
    %c0_12 = arith.constant 0 : index
    %38 = vector.load %arg2[%c160, %c0_12] : memref<288x128xf32, #tpu.memory_space<vmem>>, vector<128x128xf32>
    %cst_13 = arith.constant dense<0.000000e+00> : vector<16x128xf32>
    %39 = tpu.matmul %29, %30, %cst_13 {dimension_numbers = #tpu.dot_dimension_numbers<[1], [0], [0], [1], [0, 0, 1, 1], [], []>} : vector<16x8xf32>, vector<8x128xf32>, vector<16x128xf32> -> vector<16x128xf32>
    %40 = vector.shape_cast %39 : vector<16x128xf32> to vector<1x16x128xf32>
    %41 = vector.extract_strided_slice %40 {offsets = [0, 0, 0], sizes = [1, 1, 128], strides = [1, 1, 1]} : vector<1x16x128xf32> to vector<1x1x128xf32>
    %42 = vector.shape_cast %31 : vector<1x128xf32> to vector<1x1x128xf32>
    %43 = arith.addf %41, %42 : vector<1x1x128xf32>
    %44 = math.tanh %43 : vector<1x1x128xf32>
    %45 = arith.mulf %44, %44 : vector<1x1x128xf32>
    %cst_14 = arith.constant 1.000000e+00 : f32
    %46 = vector.broadcast %cst_14 : f32 to vector<1x1x128xf32>
    %47 = arith.subf %46, %45 : vector<1x1x128xf32>
    %48 = vector.broadcast %11 : vector<1x16x1xf32> to vector<1x16x128xf32>
    %49 = vector.broadcast %44 : vector<1x1x128xf32> to vector<1x16x128xf32>
    %50 = arith.mulf %48, %49 : vector<1x16x128xf32>
    %51 = vector.broadcast %47 : vector<1x1x128xf32> to vector<1x16x128xf32>
    %52 = arith.mulf %40, %51 : vector<1x16x128xf32>
    %53 = vector.broadcast %13 : vector<1x16x1xf32> to vector<1x16x128xf32>
    %54 = arith.mulf %53, %52 : vector<1x16x128xf32>
    %55 = arith.addf %50, %54 : vector<1x16x128xf32>
    %56 = vector.shape_cast %55 : vector<1x16x128xf32> to vector<16x128xf32>
    %cst_15 = arith.constant dense<0.000000e+00> : vector<16x128xf32>
    %57 = tpu.matmul %56, %37, %cst_15 {dimension_numbers = #tpu.dot_dimension_numbers<[1], [0], [0], [1], [0, 0, 1, 1], [], []>} : vector<16x128xf32>, vector<128x128xf32>, vector<16x128xf32> -> vector<16x128xf32>
    %58 = vector.shape_cast %57 : vector<16x128xf32> to vector<1x16x128xf32>
    %59 = vector.extract_strided_slice %58 {offsets = [0, 0, 0], sizes = [1, 1, 128], strides = [1, 1, 1]} : vector<1x16x128xf32> to vector<1x1x128xf32>
    %60 = vector.shape_cast %32 : vector<1x128xf32> to vector<1x1x128xf32>
    %61 = arith.addf %59, %60 : vector<1x1x128xf32>
    %62 = math.tanh %61 : vector<1x1x128xf32>
    %63 = arith.mulf %62, %62 : vector<1x1x128xf32>
    %cst_16 = arith.constant 1.000000e+00 : f32
    %64 = vector.broadcast %cst_16 : f32 to vector<1x1x128xf32>
    %65 = arith.subf %64, %63 : vector<1x1x128xf32>
    %66 = vector.broadcast %11 : vector<1x16x1xf32> to vector<1x16x128xf32>
    %67 = vector.broadcast %62 : vector<1x1x128xf32> to vector<1x16x128xf32>
    %68 = arith.mulf %66, %67 : vector<1x16x128xf32>
    %69 = vector.broadcast %65 : vector<1x1x128xf32> to vector<1x16x128xf32>
    %70 = arith.mulf %58, %69 : vector<1x16x128xf32>
    %71 = vector.broadcast %13 : vector<1x16x1xf32> to vector<1x16x128xf32>
    %72 = arith.mulf %71, %70 : vector<1x16x128xf32>
    %73 = arith.addf %68, %72 : vector<1x16x128xf32>
    %74 = vector.shape_cast %73 : vector<1x16x128xf32> to vector<16x128xf32>
    %cst_17 = arith.constant dense<0.000000e+00> : vector<16x128xf32>
    %75 = tpu.matmul %74, %38, %cst_17 {dimension_numbers = #tpu.dot_dimension_numbers<[1], [0], [0], [1], [0, 0, 1, 1], [], []>} : vector<16x128xf32>, vector<128x128xf32>, vector<16x128xf32> -> vector<16x128xf32>
    %76 = vector.shape_cast %75 : vector<16x128xf32> to vector<1x16x128xf32>
    %77 = vector.extract_strided_slice %76 {offsets = [0, 0, 0], sizes = [1, 1, 128], strides = [1, 1, 1]} : vector<1x16x128xf32> to vector<1x1x128xf32>
    %78 = vector.shape_cast %33 : vector<1x128xf32> to vector<1x1x128xf32>
    %79 = arith.addf %77, %78 : vector<1x1x128xf32>
    %80 = math.tanh %79 : vector<1x1x128xf32>
    %81 = arith.mulf %80, %80 : vector<1x1x128xf32>
    %cst_18 = arith.constant 1.000000e+00 : f32
    %82 = vector.broadcast %cst_18 : f32 to vector<1x1x128xf32>
    %83 = arith.subf %82, %81 : vector<1x1x128xf32>
    %84 = vector.broadcast %11 : vector<1x16x1xf32> to vector<1x16x128xf32>
    %85 = vector.broadcast %80 : vector<1x1x128xf32> to vector<1x16x128xf32>
    %86 = arith.mulf %84, %85 : vector<1x16x128xf32>
    %87 = vector.broadcast %83 : vector<1x1x128xf32> to vector<1x16x128xf32>
    %88 = arith.mulf %76, %87 : vector<1x16x128xf32>
    %89 = vector.broadcast %13 : vector<1x16x1xf32> to vector<1x16x128xf32>
    %90 = arith.mulf %89, %88 : vector<1x16x128xf32>
    %91 = arith.addf %86, %90 : vector<1x16x128xf32>
    %92 = vector.shape_cast %91 : vector<1x16x128xf32> to vector<16x128xf32>
    %93 = vector.shape_cast %92 : vector<16x128xf32> to vector<1x16x128xf32>
    %94 = vector.shape_cast %34 : vector<1x128xf32> to vector<1x1x128xf32>
    %95 = vector.broadcast %94 : vector<1x1x128xf32> to vector<1x16x128xf32>
    %96 = arith.mulf %93, %95 : vector<1x16x128xf32>
    %cst_19 = arith.constant dense<0.000000e+00> : vector<1x16xf32>
    %97 = vector.multi_reduction <add>, %96, %cst_19 [2] : vector<1x16x128xf32> to vector<1x16xf32>
    %cst_20 = arith.constant dense<0.000000e+00> : vector<1x128xf32>
    %98 = tpu.matmul %97, %36, %cst_20 {dimension_numbers = #tpu.dot_dimension_numbers<[1], [0], [0], [1], [0, 0, 1, 1], [], []>} : vector<1x16xf32>, vector<16x128xf32>, vector<1x128xf32> -> vector<1x128xf32>
    %99 = arith.addf %98, %35 : vector<1x128xf32>
    %c0_21 = arith.constant 0 : index
    %c0_22 = arith.constant 0 : index
    %100 = vector.load %arg3[%c0_21, %c0_22] : memref<1x128xf32, #tpu.memory_space<vmem>>, vector<1x128xf32>
    tpu.vector_store %arg3[%c0_21, %c0_22], %99 {strides = array<i32>} : memref<1x128xf32, #tpu.memory_space<vmem>>, vector<1x128xf32>,
    return
  }
  func.func @transform_0(%arg0: i32) -> (i32, i32) {
    %c0_i32 = arith.constant 0 : i32
    %c0_i32_0 = arith.constant 0 : i32
    return %arg0, %c0_i32 : i32, i32
  }
  func.func @transform_1(%arg0: i32) -> (i32, i32) {
    %c0_i32 = arith.constant 0 : i32
    %c0_i32_0 = arith.constant 0 : i32
    %c0_i32_1 = arith.constant 0 : i32
    return %c0_i32, %c0_i32_0 : i32, i32
  }
  func.func @transform_2(%arg0: i32) -> (i32, i32) {
    %c0_i32 = arith.constant 0 : i32
    %c0_i32_0 = arith.constant 0 : i32
    return %arg0, %c0_i32 : i32, i32
  }
}

</mosaic_0001>

<llo_original>
// kernel: cbf_forward_batched.1
$region0: #{cbf_forward_batched.1}
  #allocation0 [shape = 'u32[]', space=smem, size = 0x4, offset = 0x4, fixed_abs, tag = 'smem constant byte address 0x4 - core index']
  #allocation1 [shape = 'u32[144,128]{1,0:T(1,128)}', space=vmem, size = 0x12000, scoped, tag = 'internal scratch']
  %s0 = inlined_call_operand.hbm [shape: f32[1,8], index: 0, kind: input, shape index: {}]
  %s1 = inlined_call_operand.hbm [shape: f32[288,128], index: 1, kind: input, shape index: {}]
  %s2 = inlined_call_operand.hbm [shape: f32[1,128], index: 2, kind: output, shape index: {}]
  %s3 = sld [smem:[#allocation0]]
  $region26: #{cbf_forward_batched.1} parent=0
    _
  %s5 = ssub.s32 1, %s3
  %s6 = scalar_select 0, %s5, %s3
  $region1: #{cbf_forward_batched.1} parent=0
    #allocation2 [shape = 'u8[512]{0}', space=vmem, size = 0x400, scoped, tag = 'input window, operand 0, single buffered']
    #allocation3 [shape = 's32[1]{0}', space=sflag, size = 0x4, scoped, tag = 'scoped memory for cbf_forward_batched.1']
    #allocation4 [shape = 's32[1]{0}', space=sflag, size = 0x4, scoped, tag = 'scoped memory for cbf_forward_batched.1']
    #allocation5 [shape = 'u8[147456]{0}', space=vmem, size = 0x24000, scoped, tag = 'input window, operand 1, single buffered']
    #allocation6 [shape = 's32[1]{0}', space=sflag, size = 0x4, scoped, tag = 'scoped memory for cbf_forward_batched.1']
    #allocation7 [shape = 'u8[512]{0}', space=vmem, size = 0x400, scoped, tag = 'output window, operand 0, single buffered']
    %7 = vsyncpa [#allocation3], 0
    %8 = vsyncpa [#allocation6], 0
    %9 = vsyncpa [#allocation4], 0
    // Predicated region
    $region2: #{cbf_forward_batched.1} parent=1 // pred_check
      _
    $region3: #{cbf_forward_batched.1} parent=1 // pred_check_branch
      %11 = sbr.rel (0) target = $region5
    $region4: #{cbf_forward_batched.1} parent=1 // pred_region
      %s13 = ssub.s32 16, 16
      %14 = vsyncadd [#allocation3], %s13
      %s16 = sshll.u32 [#allocation2], 4
      %s17 = int_to_ptr.vmem [resolvable:$true] %s16
      %19 = dma.hbm_to_vmem [thread:$0]  %s0, 16, %s17, [#allocation3]
    $region5: #{cbf_forward_batched.1} parent=1 // pred_fallthru
      _
    // Predicated region
    $region6: #{cbf_forward_batched.1} parent=1 // pred_check
      _
    $region7: #{cbf_forward_batched.1} parent=1 // pred_check_branch
      %21 = sbr.rel (0) target = $region9
    $region8: #{cbf_forward_batched.1} parent=1 // pred_region
      %s23 = ssub.s32 4608, 4608
      %24 = vsyncadd [#allocation6], %s23
      %s25 = sshll.u32 [#allocation5], 4
      %s26 = int_to_ptr.vmem [resolvable:$true] %s25
      %31 = dma.hbm_to_vmem [thread:$0]  %s1, 4608, %s26, [#allocation6], 128, 128, 8
    $region9: #{cbf_forward_batched.1} parent=1 // pred_fallthru
      _
    // Predicated region
    $region10: #{cbf_forward_batched.1} parent=1 // pred_check
      _
    $region11: #{cbf_forward_batched.1} parent=1 // pred_check_branch
      %33 = sbr.rel (0) target = $region13
    $region12: #{cbf_forward_batched.1} parent=1 // pred_region
      %34 = dma.done [#allocation3], 16
    $region13: #{cbf_forward_batched.1} parent=1 // pred_fallthru
      _
    // Predicated region
    $region14: #{cbf_forward_batched.1} parent=1 // pred_check
      _
    $region15: #{cbf_forward_batched.1} parent=1 // pred_check_branch
      %36 = sbr.rel (0) target = $region17
    $region16: #{cbf_forward_batched.1} parent=1 // pred_region
      %37 = dma.done [#allocation6], 4608
    $region17: #{cbf_forward_batched.1} parent=1 // pred_fallthru
      _
    %v38 = vld [vmem:[#allocation2] sm:$0x1]
    %v39 = vld [vmem:[#allocation5 + $0xd] sm:$0x1]
    %v40 = vld [vmem:[#allocation5 + $0xe] sm:$0x1]
    %v41 = vsub.f32 %v38, %v39
    %v42 = vmul.f32 %v41, %v40
    %v43 = vlaneseq
    %v44 = vshrl.u32 %v43, 7
    %v45 = vadd.s32 %v44, 8
    %vm46 = vcmp.eq.s32.totalorder %v44, 0
    %vm47 = vcmp.eq.s32.totalorder %v45, 0
    %v48 = vsel %vm46, 1, 0
    %v49 = vsel %vm47, 1, 0
    %v50 = vcvt.s32.f32 %v48
    %v51 = vcvt.s32.f32 %v49
    %v52 = vsub.f32 1.0, %v50
    %v53 = vsub.f32 1.0, %v51
    %v54 = vlaneseq
    %v55 = vand.u32 %v54, 127
    %v56 = vadd.s32 %v55, 1
    %vm57 = vcmp.eq.s32.totalorder %v44, %v56
    %vm58 = vcmp.eq.s32.totalorder %v45, %v56
    %v59 = vsel %vm57, 1, 0
    %v60 = vsel %vm58, 1, 0
    %v61 = vcvt.s32.f32 %v59
    %v62 = vcvt.s32.f32 %v60
    %v63 = vlaneseq
    %v64 = vshrl.u32 %v63, 7
    %v65 = vsub.s32 0, %v64
    %v66 = vrot.slane %v40, %v65
    %v67 = vmul.f32 %v61, %v66
    %v68 = vmul.f32 %v62, %v66
    %v70 = vlaneseq
    %v71 = vshrl.u32 %v70, 7
    %v72 = vsub.s32 0, %v71
    %v73 = vrot.slane %v42, %v72
    %v75 = vmul.f32 %v50, %v73
    %v76 = vmul.f32 %v51, %v73
    %v77 = vadd.f32 %v75, %v67
    %v78 = vadd.f32 %v76, %v68
    %v79 = vld [vmem:[#allocation5] sm:$0xff]
    %v80 = vld [vmem:[#allocation5 + $0x8] sm:$0x1]
    %v81 = vld [vmem:[#allocation5 + $0x9] sm:$0x1]
    %v82 = vld [vmem:[#allocation5 + $0xa] sm:$0x1]
    %v83 = vld [vmem:[#allocation5 + $0xb] sm:$0x1]
    %v84 = vld [vmem:[#allocation5 + $0xc] sm:$0x1]
    %v85 = vld [vmem:[#allocation5 + $0x10] sm:$0xff]
    %v86 = vld [vmem:[#allocation5 + $0x18] sm:$0xff]
    %v87 = vld [vmem:[#allocation5 + $0x20] sm:$0xff]
    %v88 = vld [vmem:[#allocation5 + $0x28] sm:$0xff]
    %v89 = vld [vmem:[#allocation5 + $0x30] sm:$0xff]
    %v90 = vld [vmem:[#allocation5 + $0x38] sm:$0xff]
    %v91 = vld [vmem:[#allocation5 + $0x40] sm:$0xff]
    %v92 = vld [vmem:[#allocation5 + $0x48] sm:$0xff]
    %v93 = vld [vmem:[#allocation5 + $0x50] sm:$0xff]
    %v94 = vld [vmem:[#allocation5 + $0x58] sm:$0xff]
    %v95 = vld [vmem:[#allocation5 + $0x60] sm:$0xff]
    %v96 = vld [vmem:[#allocation5 + $0x68] sm:$0xff]
    %v97 = vld [vmem:[#allocation5 + $0x70] sm:$0xff]
    %v98 = vld [vmem:[#allocation5 + $0x78] sm:$0xff]
    %v99 = vld [vmem:[#allocation5 + $0x80] sm:$0xff]
    %v100 = vld [vmem:[#allocation5 + $0x88] sm:$0xff]
    %v101 = vld [vmem:[#allocation5 + $0x90] sm:$0xff]
    %v102 = vld [vmem:[#allocation5 + $0x98] sm:$0xff]
    %v103 = vld [vmem:[#allocation5 + $0xa0] sm:$0xff]
    %v104 = vld [vmem:[#allocation5 + $0xa8] sm:$0xff]
    %v105 = vld [vmem:[#allocation5 + $0xb0] sm:$0xff]
    %v106 = vld [vmem:[#allocation5 + $0xb8] sm:$0xff]
    %v107 = vld [vmem:[#allocation5 + $0xc0] sm:$0xff]
    %v108 = vld [vmem:[#allocation5 + $0xc8] sm:$0xff]
    %v109 = vld [vmem:[#allocation5 + $0xd0] sm:$0xff]
    %v110 = vld [vmem:[#allocation5 + $0xd8] sm:$0xff]
    %v111 = vld [vmem:[#allocation5 + $0xe0] sm:$0xff]
    %v112 = vld [vmem:[#allocation5 + $0xe8] sm:$0xff]
    %v113 = vld [vmem:[#allocation5 + $0xf0] sm:$0xff]
    %v114 = vld [vmem:[#allocation5 + $0xf8] sm:$0xff]
    %v115 = vld [vmem:[#allocation5 + $0x100] sm:$0xff]
    %v116 = vld [vmem:[#allocation5 + $0x108] sm:$0xff]
    %v117 = vld [vmem:[#allocation5 + $0x110] sm:$0xff]
    %v118 = vld [vmem:[#allocation5 + $0x118] sm:$0xff]
    %vm119 = vcmask 64512
    %v121 = vsel %vm119, %v77, 0
    %v124 = vsel %vm119, %v78, 0
    %126 = vmatprep.subr.mxu0 0.0
    %127 = vmatpush1.msra.mxu0 %v79
    %128 = vmatprep.subr.mxu0 0.0
    %129 = vmatpush1.msra.mxu0 0.0
    %130 = vmatprep.subr.mxu0 0.0
    %131 = vmatpush1.msra.mxu0 0.0
    %132 = vmatprep.subr.mxu0 0.0
    %133 = vmatpush1.msra.mxu0 0.0
    %134 = vmatprep.subr.mxu0 0.0
    %135 = vmatpush1.msra.mxu0 0.0
    %136 = vmatprep.subr.mxu0 0.0
    %137 = vmatpush1.msra.mxu0 0.0
    %138 = vmatprep.subr.mxu0 0.0
    %139 = vmatpush1.msra.mxu0 0.0
    %140 = vmatprep.subr.mxu0 0.0
    %141 = vmatpush1.msra.mxu0 0.0
    %142 = vmatprep.subr.mxu0 0.0
    %143 = vmatpush1.msra.mxu0 0.0
    %144 = vmatprep.subr.mxu0 0.0
    %145 = vmatpush1.msra.mxu0 0.0
    %146 = vmatprep.subr.mxu0 0.0
    %147 = vmatpush1.msra.mxu0 0.0
    %148 = vmatprep.subr.mxu0 0.0
    %149 = vmatpush1.msra.mxu0 0.0
    %150 = vmatprep.subr.mxu0 0.0
    %151 = vmatpush1.msra.mxu0 0.0
    %152 = vmatprep.subr.mxu0 0.0
    %153 = vmatpush1.msra.mxu0 0.0
    %154 = vmatprep.subr.mxu0 0.0
    %155 = vmatpush1.msra.mxu0 0.0
    %156 = vmatprep.subr.mxu0 0.0
    %157 = vmatpush1.msra.mxu0 0.0
    %158 = vmatprep.subr.mxu0 0.0
    %159 = vmatpush1.msra.mxu0 0.0
    %160 = vmatprep.subr.mxu0 0.0
    %161 = vmatpush1.msra.mxu0 0.0
    %162 = vmatprep.subr.mxu0 0.0
    %163 = vmatpush1.msra.mxu0 0.0
    %164 = vmatprep.subr.mxu0 0.0
    %165 = vmatpush1.msra.mxu0 0.0
    %166 = vmatprep.subr.mxu0 0.0
    %167 = vmatpush1.msra.mxu0 0.0
    %168 = vmatprep.subr.mxu0 0.0
    %169 = vmatpush1.msra.mxu0 0.0
    %170 = vmatprep.subr.mxu0 0.0
    %171 = vmatpush1.msra.mxu0 0.0
    %172 = vmatprep.subr.mxu0 0.0
    %173 = vmatpush1.msra.mxu0 0.0
    %174 = vmatprep.subr.mxu0 0.0
    %175 = vmatpush1.msra.mxu0 0.0
    %176 = vmatprep.subr.mxu0 0.0
    %177 = vmatpush1.msra.mxu0 0.0
    %178 = vmatprep.subr.mxu0 0.0
    %179 = vmatpush1.msra.mxu0 0.0
    %180 = vmatprep.subr.mxu0 0.0
    %181 = vmatpush1.msra.mxu0 0.0
    %182 = vmatprep.subr.mxu0 0.0
    %183 = vmatpush1.msra.mxu0 0.0
    %184 = vmatprep.subr.mxu0 0.0
    %185 = vmatpush1.msra.mxu0 0.0
    %186 = vmatprep.subr.mxu0 0.0
    %187 = vmatpush1.msra.mxu0 0.0
    %188 = vmatprep.subr.mxu0 0.0
    %189 = vmatpush1.msra.mxu0 0.0
    %190 = vmatprep.mubr.f32.mxu0 0.0
    %191 = vmatmul.mubr.f32.gmra.mrb[0].mxu0 %v121
    %v192 = vpop.f32.mrb[0].mxu0
    %v193 = vadd.f32 0.0, %v192
    %v194 = vpop.f32.mrb[0].mxu0
    %195 = vmatprep.mubr.f32.mxu0 0.0
    %196 = vmatmul.mubr.f32.gmra.mrb[0].mxu0 %v124
    %v197 = vpop.f32.mrb[0].mxu0
    %v198 = vadd.f32 0.0, %v197
    %v199 = vpop.f32.mrb[0].mxu0
    %200 = vdwg.mxu0
    %v201 = vadd.f32 %v193, %v80
    %v202 = vtanh.pop %v201
    %v203 = vmul.f32 %v202, %v202
    %v204 = vsub.f32 1.0, %v203
    %v205 = vlaneseq
    %v206 = vshrl.u32 %v205, 7
    %v207 = vsub.s32 0, %v206
    %v208 = vrot.slane %v202, %v207
    %v209 = vmul.f32 %v50, %v208
    %v210 = vmul.f32 %v51, %v208
    %v211 = vlaneseq
    %v212 = vshrl.u32 %v211, 7
    %v213 = vsub.s32 0, %v212
    %v214 = vrot.slane %v204, %v213
    %v215 = vmul.f32 %v193, %v214
    %v216 = vmul.f32 %v198, %v214
    %v217 = vmul.f32 %v52, %v215
    %v218 = vmul.f32 %v53, %v216
    %v219 = vadd.f32 %v209, %v217
    %v220 = vadd.f32 %v210, %v218
    %221 = vmatprep.subr.mxu0 0.0
    %222 = vmatpush1.msra.mxu0 %v87
    %223 = vmatprep.subr.mxu0 0.0
    %224 = vmatpush1.msra.mxu0 %v88
    %225 = vmatprep.subr.mxu0 0.0
    %226 = vmatpush1.msra.mxu0 %v89
    %227 = vmatprep.subr.mxu0 0.0
    %228 = vmatpush1.msra.mxu0 %v90
    %229 = vmatprep.subr.mxu0 0.0
    %230 = vmatpush1.msra.mxu0 %v91
    %231 = vmatprep.subr.mxu0 0.0
    %232 = vmatpush1.msra.mxu0 %v92
    %233 = vmatprep.subr.mxu0 0.0
    %234 = vmatpush1.msra.mxu0 %v93
    %235 = vmatprep.subr.mxu0 0.0
    %236 = vmatpush1.msra.mxu0 %v94
    %237 = vmatprep.subr.mxu0 0.0
    %238 = vmatpush1.msra.mxu0 %v95
    %239 = vmatprep.subr.mxu0 0.0
    %240 = vmatpush1.msra.mxu0 %v96
    %241 = vmatprep.subr.mxu0 0.0
    %242 = vmatpush1.msra.mxu0 %v97
    %243 = vmatprep.subr.mxu0 0.0
    %244 = vmatpush1.msra.mxu0 %v98
    %245 = vmatprep.subr.mxu0 0.0
    %246 = vmatpush1.msra.mxu0 %v99
    %247 = vmatprep.subr.mxu0 0.0
    %248 = vmatpush1.msra.mxu0 %v100
    %249 = vmatprep.subr.mxu0 0.0
    %250 = vmatpush1.msra.mxu0 %v101
    %251 = vmatprep.subr.mxu0 0.0
    %252 = vmatpush1.msra.mxu0 %v102
    %253 = vmatprep.subr.mxu0 0.0
    %254 = vmatpush1.msra.mxu0 0.0
    %255 = vmatprep.subr.mxu0 0.0
    %256 = vmatpush1.msra.mxu0 0.0
    %257 = vmatprep.subr.mxu0 0.0
    %258 = vmatpush1.msra.mxu0 0.0
    %259 = vmatprep.subr.mxu0 0.0
    %260 = vmatpush1.msra.mxu0 0.0
    %261 = vmatprep.subr.mxu0 0.0
    %262 = vmatpush1.msra.mxu0 0.0
    %263 = vmatprep.subr.mxu0 0.0
    %264 = vmatpush1.msra.mxu0 0.0
    %265 = vmatprep.subr.mxu0 0.0
    %266 = vmatpush1.msra.mxu0 0.0
    %267 = vmatprep.subr.mxu0 0.0
    %268 = vmatpush1.msra.mxu0 0.0
    %269 = vmatprep.subr.mxu0 0.0
    %270 = vmatpush1.msra.mxu0 0.0
    %271 = vmatprep.subr.mxu0 0.0
    %272 = vmatpush1.msra.mxu0 0.0
    %273 = vmatprep.subr.mxu0 0.0
    %274 = vmatpush1.msra.mxu0 0.0
    %275 = vmatprep.subr.mxu0 0.0
    %276 = vmatpush1.msra.mxu0 0.0
    %277 = vmatprep.subr.mxu0 0.0
    %278 = vmatpush1.msra.mxu0 0.0
    %279 = vmatprep.subr.mxu0 0.0
    %280 = vmatpush1.msra.mxu0 0.0
    %281 = vmatprep.subr.mxu0 0.0
    %282 = vmatpush1.msra.mxu0 0.0
    %283 = vmatprep.subr.mxu0 0.0
    %284 = vmatpush1.msra.mxu0 0.0
    %285 = vmatprep.mubr.f32.mxu0 0.0
    %286 = vmatmul.mubr.f32.gmra.mrb[0].mxu0 %v219
    %v287 = vpop.f32.mrb[0].mxu0
    %v288 = vadd.f32 0.0, %v287
    %v289 = vpop.f32.mrb[0].mxu0
    %290 = vmatprep.mubr.f32.mxu0 0.0
    %291 = vmatmul.mubr.f32.gmra.mrb[0].mxu0 %v220
    %v292 = vpop.f32.mrb[0].mxu0
    %v293 = vadd.f32 0.0, %v292
    %v294 = vpop.f32.mrb[0].mxu0
    %295 = vdwg.mxu0
    %v296 = vadd.f32 %v288, %v81
    %v297 = vtanh.pop %v296
    %v298 = vmul.f32 %v297, %v297
    %v299 = vsub.f32 1.0, %v298
    %v300 = vlaneseq
    %v301 = vshrl.u32 %v300, 7
    %v302 = vsub.s32 0, %v301
    %v303 = vrot.slane %v297, %v302
    %v304 = vmul.f32 %v50, %v303
    %v305 = vmul.f32 %v51, %v303
    %v306 = vlaneseq
    %v307 = vshrl.u32 %v306, 7
    %v308 = vsub.s32 0, %v307
    %v309 = vrot.slane %v299, %v308
    %v310 = vmul.f32 %v288, %v309
    %v311 = vmul.f32 %v293, %v309
    %v312 = vmul.f32 %v52, %v310
    %v313 = vmul.f32 %v53, %v311
    %v314 = vadd.f32 %v304, %v312
    %v315 = vadd.f32 %v305, %v313
    %316 = vmatprep.subr.mxu0 0.0
    %317 = vmatpush1.msra.mxu0 %v103
    %318 = vmatprep.subr.mxu0 0.0
    %319 = vmatpush1.msra.mxu0 %v104
    %320 = vmatprep.subr.mxu0 0.0
    %321 = vmatpush1.msra.mxu0 %v105
    %322 = vmatprep.subr.mxu0 0.0
    %323 = vmatpush1.msra.mxu0 %v106
    %324 = vmatprep.subr.mxu0 0.0
    %325 = vmatpush1.msra.mxu0 %v107
    %326 = vmatprep.subr.mxu0 0.0
    %327 = vmatpush1.msra.mxu0 %v108
    %328 = vmatprep.subr.mxu0 0.0
    %329 = vmatpush1.msra.mxu0 %v109
    %330 = vmatprep.subr.mxu0 0.0
    %331 = vmatpush1.msra.mxu0 %v110
    %332 = vmatprep.subr.mxu0 0.0
    %333 = vmatpush1.msra.mxu0 %v111
    %334 = vmatprep.subr.mxu0 0.0
    %335 = vmatpush1.msra.mxu0 %v112
    %336 = vmatprep.subr.mxu0 0.0
    %337 = vmatpush1.msra.mxu0 %v113
    %338 = vmatprep.subr.mxu0 0.0
    %339 = vmatpush1.msra.mxu0 %v114
    %340 = vmatprep.subr.mxu0 0.0
    %341 = vmatpush1.msra.mxu0 %v115
    %342 = vmatprep.subr.mxu0 0.0
    %343 = vmatpush1.msra.mxu0 %v116
    %344 = vmatprep.subr.mxu0 0.0
    %345 = vmatpush1.msra.mxu0 %v117
    %346 = vmatprep.subr.mxu0 0.0
    %347 = vmatpush1.msra.mxu0 %v118
    %348 = vmatprep.subr.mxu0 0.0
    %349 = vmatpush1.msra.mxu0 0.0
    %350 = vmatprep.subr.mxu0 0.0
    %351 = vmatpush1.msra.mxu0 0.0
    %352 = vmatprep.subr.mxu0 0.0
    %353 = vmatpush1.msra.mxu0 0.0
    %354 = vmatprep.subr.mxu0 0.0
    %355 = vmatpush1.msra.mxu0 0.0
    %356 = vmatprep.subr.mxu0 0.0
    %357 = vmatpush1.msra.mxu0 0.0
    %358 = vmatprep.subr.mxu0 0.0
    %359 = vmatpush1.msra.mxu0 0.0
    %360 = vmatprep.subr.mxu0 0.0
    %361 = vmatpush1.msra.mxu0 0.0
    %362 = vmatprep.subr.mxu0 0.0
    %363 = vmatpush1.msra.mxu0 0.0
    %364 = vmatprep.subr.mxu0 0.0
    %365 = vmatpush1.msra.mxu0 0.0
    %366 = vmatprep.subr.mxu0 0.0
    %367 = vmatpush1.msra.mxu0 0.0
    %368 = vmatprep.subr.mxu0 0.0
    %369 = vmatpush1.msra.mxu0 0.0
    %370 = vmatprep.subr.mxu0 0.0
    %371 = vmatpush1.msra.mxu0 0.0
    %372 = vmatprep.subr.mxu0 0.0
    %373 = vmatpush1.msra.mxu0 0.0
    %374 = vmatprep.subr.mxu0 0.0
    %375 = vmatpush1.msra.mxu0 0.0
    %376 = vmatprep.subr.mxu0 0.0
    %377 = vmatpush1.msra.mxu0 0.0
    %378 = vmatprep.subr.mxu0 0.0
    %379 = vmatpush1.msra.mxu0 0.0
    %380 = vmatprep.mubr.f32.mxu0 0.0
    %381 = vmatmul.mubr.f32.gmra.mrb[0].mxu0 %v314
    %v382 = vpop.f32.mrb[0].mxu0
    %v383 = vadd.f32 0.0, %v382
    %v384 = vpop.f32.mrb[0].mxu0
    %385 = vmatprep.mubr.f32.mxu0 0.0
    %386 = vmatmul.mubr.f32.gmra.mrb[0].mxu0 %v315
    %v387 = vpop.f32.mrb[0].mxu0
    %v388 = vadd.f32 0.0, %v387
    %v389 = vpop.f32.mrb[0].mxu0
    %390 = vdwg.mxu0
    %v391 = vadd.f32 %v383, %v82
    %v392 = vtanh.pop %v391
    %v393 = vmul.f32 %v392, %v392
    %v394 = vsub.f32 1.0, %v393
    %v395 = vlaneseq
    %v396 = vshrl.u32 %v395, 7
    %v397 = vsub.s32 0, %v396
    %v398 = vrot.slane %v392, %v397
    %v399 = vmul.f32 %v50, %v398
    %v400 = vmul.f32 %v51, %v398
    %v401 = vlaneseq
    %v402 = vshrl.u32 %v401, 7
    %v403 = vsub.s32 0, %v402
    %v404 = vrot.slane %v394, %v403
    %v405 = vmul.f32 %v383, %v404
    %v406 = vmul.f32 %v388, %v404
    %v407 = vmul.f32 %v52, %v405
    %v408 = vmul.f32 %v53, %v406
    %v409 = vadd.f32 %v399, %v407
    %v410 = vadd.f32 %v400, %v408
    %v411 = vlaneseq
    %v412 = vshrl.u32 %v411, 7
    %v413 = vsub.s32 0, %v412
    %v414 = vrot.slane %v83, %v413
    %v415 = vmul.f32 %v409, %v414
    %v416 = vmul.f32 %v410, %v414
    %417 = vadd.xlane.f32.xlu0 %v415
    %v418 = vpop.xlane.xlu0 %417
    %419 = vadd.xlane.f32.xlu0 %v416
    %v420 = vpop.xlane.xlu0 %419
    %v423 = vlaneseq
    %v424 = vshrl.u32 %v423, 7
    %v425 = vsub.s32 %v55, %v424
    %v426 = vrot.slane %v418, %v425
    %v427 = vadd.s32 %v55, 4294967288
    %v428 = vlaneseq
    %v429 = vshrl.u32 %v428, 7
    %v430 = vsub.s32 %v427, %v429
    %v431 = vrot.slane %v420, %v430
    %vm432 = vcmask 130112
    %v433 = vsel %vm432, %v431, %v426
    %vm434 = vcmask 130048
    %v435 = vsel %vm434, %v433, 0
    %437 = vmatprep.subr.mxu0 0.0
    %438 = vmatpush1.msra.mxu0 %v85
    %439 = vmatprep.subr.mxu0 0.0
    %440 = vmatpush1.msra.mxu0 %v86
    %441 = vmatprep.subr.mxu0 0.0
    %442 = vmatpush1.msra.mxu0 0.0
    %443 = vmatprep.subr.mxu0 0.0
    %444 = vmatpush1.msra.mxu0 0.0
    %445 = vmatprep.subr.mxu0 0.0
    %446 = vmatpush1.msra.mxu0 0.0
    %447 = vmatprep.subr.mxu0 0.0
    %448 = vmatpush1.msra.mxu0 0.0
    %449 = vmatprep.subr.mxu0 0.0
    %450 = vmatpush1.msra.mxu0 0.0
    %451 = vmatprep.subr.mxu0 0.0
    %452 = vmatpush1.msra.mxu0 0.0
    %453 = vmatprep.subr.mxu0 0.0
    %454 = vmatpush1.msra.mxu0 0.0
    %455 = vmatprep.subr.mxu0 0.0
    %456 = vmatpush1.msra.mxu0 0.0
    %457 = vmatprep.subr.mxu0 0.0
    %458 = vmatpush1.msra.mxu0 0.0
    %459 = vmatprep.subr.mxu0 0.0
    %460 = vmatpush1.msra.mxu0 0.0
    %461 = vmatprep.subr.mxu0 0.0
    %462 = vmatpush1.msra.mxu0 0.0
    %463 = vmatprep.subr.mxu0 0.0
    %464 = vmatpush1.msra.mxu0 0.0
    %465 = vmatprep.subr.mxu0 0.0
    %466 = vmatpush1.msra.mxu0 0.0
    %467 = vmatprep.subr.mxu0 0.0
    %468 = vmatpush1.msra.mxu0 0.0
    %469 = vmatprep.subr.mxu0 0.0
    %470 = vmatpush1.msra.mxu0 0.0
    %471 = vmatprep.subr.mxu0 0.0
    %472 = vmatpush1.msra.mxu0 0.0
    %473 = vmatprep.subr.mxu0 0.0
    %474 = vmatpush1.msra.mxu0 0.0
    %475 = vmatprep.subr.mxu0 0.0
    %476 = vmatpush1.msra.mxu0 0.0
    %477 = vmatprep.subr.mxu0 0.0
    %478 = vmatpush1.msra.mxu0 0.0
    %479 = vmatprep.subr.mxu0 0.0
    %480 = vmatpush1.msra.mxu0 0.0
    %481 = vmatprep.subr.mxu0 0.0
    %482 = vmatpush1.msra.mxu0 0.0
    %483 = vmatprep.subr.mxu0 0.0
    %484 = vmatpush1.msra.mxu0 0.0
    %485 = vmatprep.subr.mxu0 0.0
    %486 = vmatpush1.msra.mxu0 0.0
    %487 = vmatprep.subr.mxu0 0.0
    %488 = vmatpush1.msra.mxu0 0.0
    %489 = vmatprep.subr.mxu0 0.0
    %490 = vmatpush1.msra.mxu0 0.0
    %491 = vmatprep.subr.mxu0 0.0
    %492 = vmatpush1.msra.mxu0 0.0
    %493 = vmatprep.subr.mxu0 0.0
    %494 = vmatpush1.msra.mxu0 0.0
    %495 = vmatprep.subr.mxu0 0.0
    %496 = vmatpush1.msra.mxu0 0.0
    %497 = vmatprep.subr.mxu0 0.0
    %498 = vmatpush1.msra.mxu0 0.0
    %499 = vmatprep.subr.mxu0 0.0
    %500 = vmatpush1.msra.mxu0 0.0
    %501 = vmatprep.mubr.f32.mxu0 0.0
    %502 = vmatmul.mubr.f32.gmra.mrb[0].mxu0 %v435
    %v503 = vpop.f32.mrb[0].mxu0
    %v504 = vadd.f32 %v84, %v503
    %v505 = vpop.f32.mrb[0].mxu0
    %506 = vdwg.mxu0
    %507 = vst [vmem:[#allocation7] sm:$0x1] %v504
    // Predicated region
    $region18: #{cbf_forward_batched.1} parent=1 // pred_check
      _
    $region19: #{cbf_forward_batched.1} parent=1 // pred_check_branch
      %509 = sbr.rel (0) target = $region21
    $region20: #{cbf_forward_batched.1} parent=1 // pred_region
      %s511 = ssub.s32 16, 16
      %512 = vsyncadd [#allocation4], %s511
      %s514 = sshll.u32 [#allocation7], 4
      %s515 = int_to_ptr.vmem [resolvable:$true] %s514
      %517 = dma.vmem_to_hbm [thread:$0]  %s515, 16, %s2, [#allocation4]
    $region21: #{cbf_forward_batched.1} parent=1 // pred_fallthru
      _
    // Predicated region
    $region22: #{cbf_forward_batched.1} parent=1 // pred_check
      _
    $region23: #{cbf_forward_batched.1} parent=1 // pred_check_branch
      %519 = sbr.rel (0) target = $region25
    $region24: #{cbf_forward_batched.1} parent=1 // pred_region
      %520 = dma.done [#allocation4], 16
    $region25: #{cbf_forward_batched.1} parent=1 // pred_fallthru
      _
    %521 = vsyncpa [#allocation3], 1
    %522 = vsyncpa [#allocation6], 1
    %523 = vsyncpa [#allocation4], 1

</llo_original>
